<compile_context>
chip_gen: v7x
topology: tpu7x:2x2x1
jax: 0.10.0
libtpu: 0.0.40
codegen_flags: <defaults>
</compile_context>

<pallas_src>
import functools

import jax
import jax.numpy as jnp
from jax.experimental import pallas as pl
from jax.experimental.pallas import tpu as pltpu

_LANE = 128
_SINGLE_PASS_MAX_B = 1024   # whole-batch single-pass kernel up to this size
_TILE_B = 512               # batch tile for the pipelined two-phase kernel
_BN_EPS = 1e-5


def _round_up(x, m):
    return ((x + m - 1) // m) * m


# -----------------------------------------------------------------------------
# Kernel 1: single-pass (whole batch resident in VMEM, one grid step).
# -----------------------------------------------------------------------------
def _predictor_single_pass_kernel(state_ref, action_ref, w1s_ref, w1a_ref,
                                  gamma_ref, beta_ref, w2_ref, b2_ref,
                                  out_ref):
    # Linear-1 (no bias: training-mode BN right after Linear cancels it).
    s_bf = state_ref[...].astype(jnp.bfloat16)
    h0 = jnp.dot(s_bf, w1s_ref[...], preferred_element_type=jnp.float32)
    # Action path: contraction depth is tiny (action_dim=2) -> VPU broadcast
    # FMAs instead of a second (mostly idle) MXU dot.
    a = action_ref[...]
    for c in range(a.shape[1]):                       # static unroll
        h0 = h0 + a[:, c:c + 1] * w1a_ref[c:c + 1, :]

    # Full-batch BatchNorm statistics (centered, biased variance like PyTorch).
    mean0 = jnp.mean(h0, axis=0, keepdims=True)
    d = h0 - mean0
    var = jnp.mean(d * d, axis=0, keepdims=True)
    scale = gamma_ref[...] * jax.lax.rsqrt(var + _BN_EPS)   # gamma folded in
    hn = jnp.maximum(d * scale + beta_ref[...], 0.0)        # BN + ReLU

    out = jnp.dot(hn.astype(jnp.bfloat16), w2_ref[...],
                  preferred_element_type=jnp.float32) + b2_ref[...]
    out_ref[...] = out.astype(out_ref.dtype)


# -----------------------------------------------------------------------------
# Kernel 2: pipelined two-phase kernel for large batches.
#   grid = (2, nb):  phase 0 -> Linear-1 + stats accumulation (h cached),
#                    phase 1 -> normalize + ReLU + Linear-2 from the cache.
# -----------------------------------------------------------------------------
def _predictor_two_phase_kernel(state_ref, action_ref, w1s_ref, w1a_ref,
                                gamma_ref, beta_ref, w2_ref, b2_ref,
                                out_ref,
                                hcache_ref, sum_ref, sumsq_ref, ss_ref,
                                *, inv_batch):
    p = pl.program_id(0)   # phase: 0 = stats, 1 = apply
    i = pl.program_id(1)   # batch tile

    @pl.when(p == 0)
    def _stats_phase():
        @pl.when(i == 0)
        def _():
            sum_ref[...] = jnp.zeros_like(sum_ref)
            sumsq_ref[...] = jnp.zeros_like(sumsq_ref)
            # Defensive: the parked output block (block 0) is never flushed
            # during phase 0, but make its contents deterministic anyway.
            out_ref[...] = jnp.zeros_like(out_ref)

        s_bf = state_ref[...].astype(jnp.bfloat16)
        h0 = jnp.dot(s_bf, w1s_ref[...], preferred_element_type=jnp.float32)
        a = action_ref[...]
        for c in range(a.shape[1]):                   # static unroll (ACT small)
            h0 = h0 + a[:, c:c + 1] * w1a_ref[c:c + 1, :]

        # Cache Linear-1 output so phase 1 neither re-reads inputs from HBM
        # nor recomputes the first matmul.
        hcache_ref[i] = h0.astype(hcache_ref.dtype)

        # One-pass stats.  Zero-padded batch rows contribute 0 to both sums so
        # no row mask is needed; inv_batch is 1/true_batch.
        # TODO(synk): one-pass E[x^2]-E[x]^2 can cancel for strongly offset
        # activations; h0 excludes b1 (BN is invariant to it), which keeps the
        # mean small for a Linear layer.
        sum_ref[...] = sum_ref[...] + jnp.sum(h0, axis=0, keepdims=True)
        sumsq_ref[...] = sumsq_ref[...] + jnp.sum(h0 * h0, axis=0, keepdims=True)

    @pl.when(p == 1)
    def _apply_phase():
        @pl.when(i == 0)
        def _():
            # Hoist scale/shift: computed once per batch, reused by all tiles.
            mean0 = sum_ref[...] * inv_batch
            var = jnp.maximum(sumsq_ref[...] * inv_batch - mean0 * mean0, 0.0)
            scale = gamma_ref[...] * jax.lax.rsqrt(var + _BN_EPS)
            ss_ref[0:1, :] = scale
            ss_ref[1:2, :] = beta_ref[...] - mean0 * scale

        h0 = hcache_ref[i].astype(jnp.float32)
        hn = jnp.maximum(h0 * ss_ref[0:1, :] + ss_ref[1:2, :], 0.0)  # BN + ReLU
        out = jnp.dot(hn.astype(jnp.bfloat16), w2_ref[...],
                      preferred_element_type=jnp.float32) + b2_ref[...]
        out_ref[...] = out.astype(out_ref.dtype)


def _vmem_limit_bytes(tile_b, emb, act, hp, cache_rows, cache_elem_bytes):
    """Explicit VMEM budget (weights + double-buffered I/O tiles + h-cache)."""
    weights = emb * hp * 2 + act * hp * 4 + hp * hp * 2 + 3 * hp * 4
    io = 2 * tile_b * (emb + act) * 4 + 2 * tile_b * hp * 4
    cache = cache_rows * hp * cache_elem_bytes
    stats = 4 * hp * 4
    need = weights + io + cache + stats
    # 1.3x margin, floor at the common 32 MiB scoped default, cap at v7x's
    # 64 MiB physical VMEM so the request stays portable.
    return int(min(64 * 2 ** 20, max(32 * 2 ** 20, 1.3 * need)))


@jax.jit
def predictor_forward(state, action, params):
    """state: (B, EMB) f32, action: (B, ACT) f32 -> (B, EMB) f32."""
    w1s, w1a, _b1, gamma, beta, w2, b2 = params   # b1 cancels under train-mode BN
    B, EMB = state.shape
    ACT = action.shape[1]
    Hp = w2.shape[1]          # lane-padded hidden/output width (multiple of 128)
    H = EMB

    # ---------------- single-pass fast path (common small-B case) -----------
    if B <= _SINGLE_PASS_MAX_B:
        out = pl.pallas_call(
            _predictor_single_pass_kernel,
            out_shape=jax.ShapeDtypeStruct((B, Hp), jnp.float32),
            grid_spec=pltpu.PrefetchScalarGridSpec(
                num_scalar_prefetch=0,
                grid=(1,),
                in_specs=[
                    pl.BlockSpec((B, EMB), lambda i: (0, 0)),   # state
                    pl.BlockSpec((B, ACT), lambda i: (0, 0)),   # action
                    pl.BlockSpec((EMB, Hp), lambda i: (0, 0)),  # W1[:EMB] (bf16)
                    pl.BlockSpec((ACT, Hp), lambda i: (0, 0)),  # W1[EMB:] (f32)
                    pl.BlockSpec((1, Hp), lambda i: (0, 0)),    # gamma
                    pl.BlockSpec((1, Hp), lambda i: (0, 0)),    # beta
                    pl.BlockSpec((Hp, Hp), lambda i: (0, 0)),   # W2 (bf16)
                    pl.BlockSpec((1, Hp), lambda i: (0, 0)),    # b2
                ],
                out_specs=pl.BlockSpec((B, Hp), lambda i: (0, 0)),
            ),
            compiler_params=pltpu.CompilerParams(
                dimension_semantics=("arbitrary",),
                vmem_limit_bytes=_vmem_limit_bytes(B, EMB, ACT, Hp, B, 4),
            ),
        )(state, action, w1s, w1a, gamma, beta, w2, b2)
        return out[:, :H]

    # ---------------- pipelined two-phase path (large B) --------------------
    TILE_B = _TILE_B
    B_pad = _round_up(B, TILE_B)
    nb = B_pad // TILE_B
    if B_pad != B:
        # Zero-padded rows contribute nothing to the BN sums; their outputs
        # are sliced away below.
        state = jnp.pad(state, ((0, B_pad - B), (0, 0)))
        action = jnp.pad(action, ((0, B_pad - B), (0, 0)))

    # f32 h-cache unless it would blow VMEM (v7x: 64 MiB physical).
    if B_pad * Hp * 4 <= 24 * 2 ** 20:
        cache_dtype, cache_elem = jnp.float32, 4
    else:
        cache_dtype, cache_elem = jnp.bfloat16, 2

    kernel = functools.partial(_predictor_two_phase_kernel, inv_batch=1.0 / B)

    grid_spec = pltpu.PrefetchScalarGridSpec(
        num_scalar_prefetch=0,
        grid=(2, nb),                                         # (phase, tile)
        in_specs=[
            # Inputs are only needed in phase 0; park them on block 0 during
            # phase 1 so no extra HBM reads are issued.
            pl.BlockSpec((TILE_B, EMB), lambda p, i: (i * (1 - p), 0)),
            pl.BlockSpec((TILE_B, ACT), lambda p, i: (i * (1 - p), 0)),
            pl.BlockSpec((EMB, Hp), lambda p, i: (0, 0)),     # W1[:EMB] (bf16)
            pl.BlockSpec((ACT, Hp), lambda p, i: (0, 0)),     # W1[EMB:] (f32)
            pl.BlockSpec((1, Hp), lambda p, i: (0, 0)),       # gamma
            pl.BlockSpec((1, Hp), lambda p, i: (0, 0)),       # beta
            pl.BlockSpec((Hp, Hp), lambda p, i: (0, 0)),      # W2 (bf16)
            pl.BlockSpec((1, Hp), lambda p, i: (0, 0)),       # b2
        ],
        # Output only produced in phase 1; `i * p` keeps phase-0 iterations
        # parked on block 0 so no half-written block is flushed early.
        out_specs=pl.BlockSpec((TILE_B, Hp), lambda p, i: (i * p, 0)),
        scratch_shapes=[
            pltpu.VMEM((nb, TILE_B, Hp), cache_dtype),   # Linear-1 output cache
            pltpu.VMEM((1, Hp), jnp.float32),            # sum(h0)
            pltpu.VMEM((1, Hp), jnp.float32),            # sum(h0*h0)
            pltpu.VMEM((2, Hp), jnp.float32),            # hoisted [scale; shift]
        ],
    )

    out = pl.pallas_call(
        kernel,
        out_shape=jax.ShapeDtypeStruct((B_pad, Hp), jnp.float32),
        grid_spec=grid_spec,
        compiler_params=pltpu.CompilerParams(
            # Both axes "arbitrary": BN stats / h-cache are sequential
            # cross-iteration dependencies (single-TC stats reduction).
            dimension_semantics=("arbitrary", "arbitrary"),
            vmem_limit_bytes=_vmem_limit_bytes(TILE_B, EMB, ACT, Hp, B_pad,
                                               cache_elem),
        ),
    )(state, action, w1s, w1a, gamma, beta, w2, b2)

    return out[:B, :H]


def init_predictor_params(key, embedding_dim, action_dim):
    """PyTorch-default init (Linear: U(+-1/sqrt(fan_in)); BN: gamma=1, beta=0),
    lane-padded to 128 features; W1 split into state (bf16, MXU) and action
    (f32, VPU) parts; W2 stored bf16."""
    d_in = embedding_dim + action_dim
    h = embedding_dim
    hp = _round_up(h, _LANE)
    k1, k2, k3, k4 = jax.random.split(key, 4)

    bound1 = 1.0 / (d_in ** 0.5)
    w1 = jax.random.uniform(k1, (d_in, h), jnp.float32, -bound1, bound1)
    b1 = jax.random.uniform(k2, (1, h), jnp.float32, -bound1, bound1)

    gamma = jnp.ones((1, h), jnp.float32)
    beta = jnp.zeros((1, h), jnp.float32)

    bound2 = 1.0 / (h ** 0.5)
    w2 = jax.random.uniform(k3, (h, h), jnp.float32, -bound2, bound2)
    b2 = jax.random.uniform(k4, (1, h), jnp.float32, -bound2, bound2)

    pad_c = ((0, 0), (0, hp - h))
    w1s = jnp.pad(w1[:embedding_dim], pad_c).astype(jnp.bfloat16)   # MXU path
    w1a = jnp.pad(w1[embedding_dim:], pad_c)                        # VPU path
    b1p = jnp.pad(b1, pad_c)          # kept for reference only (cancels in BN)
    gammap = jnp.pad(gamma, pad_c)    # padded gamma = 0 -> padded lanes stay 0
    betap = jnp.pad(beta, pad_c)
    w2p = jnp.pad(w2, ((0, hp - h), (0, hp - h))).astype(jnp.bfloat16)
    b2p = jnp.pad(b2, pad_c)
    return (w1s, w1a, b1p, gammap, betap, w2p, b2p)


def reference_forward(state, action, params):
    """Pure-JAX reference: textbook Linear->BN(train)->ReLU->Linear with the
    same matmul dtypes as the kernel (bf16 MXU inputs, f32 accumulation)."""
    w1s, w1a, b1, gamma, beta, w2, b2 = params
    H = state.shape[1]
    h = (jnp.dot(state.astype(jnp.bfloat16), w1s,
                 preferred_element_type=jnp.float32)
         + jnp.dot(action, w1a, precision=jax.lax.Precision.HIGHEST)
         + b1)
    mean = jnp.mean(h, axis=0, keepdims=True)
    var = jnp.mean((h - mean) ** 2, axis=0, keepdims=True)
    hn = jnp.maximum((h - mean) * jax.lax.rsqrt(var + _BN_EPS) * gamma + beta,
                     0.0)
    out = jnp.dot(hn.astype(jnp.bfloat16), w2,
                  preferred_element_type=jnp.float32) + b2
    return out[:, :H]


if __name__ == "__main__":
    # Small shapes consistent with Predictor(embedding_dim=32, action_dim=2).
    EMB, ACT = 32, 2
    key = jax.random.PRNGKey(0)
    k_params, k_s1, k_a1, k_s2, k_a2 = jax.random.split(key, 5)
    params = init_predictor_params(k_params, EMB, ACT)

    # Case 1: small batch -> single-pass kernel.
    B1 = 8
    state1 = jax.random.normal(k_s1, (B1, EMB), jnp.float32)
    action1 = jax.random.normal(k_a1, (B1, ACT), jnp.float32)
    out1 = jax.block_until_ready(predictor_forward(state1, action1, params))
    ref1 = reference_forward(state1, action1, params)
    assert out1.shape == (B1, EMB), out1.shape
    assert jnp.allclose(out1, ref1, atol=2e-3, rtol=2e-3), \
        float(jnp.max(jnp.abs(out1 - ref1)))

    # Case 2: larger, non-tile-multiple batch -> padded two-phase kernel.
    B2 = 1280
    state2 = jax.random.normal(k_s2, (B2, EMB), jnp.float32)
    action2 = jax.random.normal(k_a2, (B2, ACT), jnp.float32)
    out2 = jax.block_until_ready(predictor_forward(state2, action2, params))
    ref2 = reference_forward(state2, action2, params)
    assert out2.shape == (B2, EMB), out2.shape
    assert jnp.allclose(out2, ref2, atol=2e-3, rtol=2e-3), \
        float(jnp.max(jnp.abs(out2 - ref2)))

    print("KERNEL_OK")
</pallas_src>

<mosaic_0001>
module attributes {stable_mosaic.version = 11 : i64} {
  func.func @_predictor_single_pass_kernel(%arg0: i32, %arg1: memref<8x32xf32, #tpu.memory_space<vmem>>, %arg2: memref<8x2xf32, #tpu.memory_space<vmem>>, %arg3: memref<32x128xbf16, #tpu.memory_space<vmem>>, %arg4: memref<2x128xf32, #tpu.memory_space<vmem>>, %arg5: memref<1x128xf32, #tpu.memory_space<vmem>>, %arg6: memref<1x128xf32, #tpu.memory_space<vmem>>, %arg7: memref<128x128xbf16, #tpu.memory_space<vmem>>, %arg8: memref<1x128xf32, #tpu.memory_space<vmem>>, %arg9: memref<8x128xf32, #tpu.memory_space<vmem>>) attributes {dimension_semantics = [#tpu.dimension_semantics<arbitrary>], iteration_bounds = array<i64: 1>, scalar_prefetch = 0 : i64, scratch_operands = 0 : i64, tpu.core_type = #tpu.core_type<tc>, window_params = [{pipeline_mode = #tpu.pipeline_mode<synchronous>, transform_indices = @transform_0, window_bounds = array<i64: 8, 32>}, {pipeline_mode = #tpu.pipeline_mode<synchronous>, transform_indices = @transform_1, window_bounds = array<i64: 8, 2>}, {pipeline_mode = #tpu.pipeline_mode<synchronous>, transform_indices = @transform_2, window_bounds = array<i64: 32, 128>}, {pipeline_mode = #tpu.pipeline_mode<synchronous>, transform_indices = @transform_3, window_bounds = array<i64: 2, 128>}, {pipeline_mode = #tpu.pipeline_mode<synchronous>, transform_indices = @transform_4, window_bounds = array<i64: 1, 128>}, {pipeline_mode = #tpu.pipeline_mode<synchronous>, transform_indices = @transform_5, window_bounds = array<i64: 1, 128>}, {pipeline_mode = #tpu.pipeline_mode<synchronous>, transform_indices = @transform_6, window_bounds = array<i64: 128, 128>}, {pipeline_mode = #tpu.pipeline_mode<synchronous>, transform_indices = @transform_7, window_bounds = array<i64: 1, 128>}, {pipeline_mode = #tpu.pipeline_mode<synchronous>, transform_indices = @transform_8, window_bounds = array<i64: 8, 128>}]} {
    %c0 = arith.constant 0 : index
    %c0_0 = arith.constant 0 : index
    %0 = vector.load %arg1[%c0, %c0_0] : memref<8x32xf32, #tpu.memory_space<vmem>>, vector<8x32xf32>
    %1 = arith.truncf %0 : vector<8x32xf32> to vector<8x32xbf16>
    %c0_1 = arith.constant 0 : index
    %c0_2 = arith.constant 0 : index
    %2 = vector.load %arg3[%c0_1, %c0_2] : memref<32x128xbf16, #tpu.memory_space<vmem>>, vector<32x128xbf16>
    %cst = arith.constant dense<0.000000e+00> : vector<8x128xf32>
    %3 = tpu.matmul %1, %2, %cst {dimension_numbers = #tpu.dot_dimension_numbers<[1], [0], [0], [1], [0, 0, 1, 1], [], []>} : vector<8x32xbf16>, vector<32x128xbf16>, vector<8x128xf32> -> vector<8x128xf32>
    %c0_3 = arith.constant 0 : index
    %c0_4 = arith.constant 0 : index
    %4 = vector.load %arg2[%c0_3, %c0_4] : memref<8x2xf32, #tpu.memory_space<vmem>>, vector<8x2xf32>
    %5 = vector.extract_strided_slice %4 {offsets = [0, 0], sizes = [8, 1], strides = [1, 1]} : vector<8x2xf32> to vector<8x1xf32>
    %c0_5 = arith.constant 0 : index
    %c0_6 = arith.constant 0 : index
    %6 = vector.load %arg4[%c0_5, %c0_6] : memref<2x128xf32, #tpu.memory_space<vmem>>, vector<1x128xf32>
    %7 = vector.broadcast %5 : vector<8x1xf32> to vector<8x128xf32>
    %8 = vector.broadcast %6 : vector<1x128xf32> to vector<8x128xf32>
    %9 = arith.mulf %7, %8 : vector<8x128xf32>
    %10 = arith.addf %3, %9 : vector<8x128xf32>
    %11 = vector.extract_strided_slice %4 {offsets = [0, 1], sizes = [8, 1], strides = [1, 1]} : vector<8x2xf32> to vector<8x1xf32>
    %c1 = arith.constant 1 : index
    %c0_7 = arith.constant 0 : index
    %12 = vector.load %arg4[%c1, %c0_7] : memref<2x128xf32, #tpu.memory_space<vmem>>, vector<1x128xf32>
    %13 = vector.broadcast %11 : vector<8x1xf32> to vector<8x128xf32>
    %14 = vector.broadcast %12 : vector<1x128xf32> to vector<8x128xf32>
    %15 = arith.mulf %13, %14 : vector<8x128xf32>
    %16 = arith.addf %10, %15 : vector<8x128xf32>
    %cst_8 = arith.constant dense<0.000000e+00> : vector<128xf32>
    %17 = vector.multi_reduction <add>, %16, %cst_8 [0] : vector<8x128xf32> to vector<128xf32>
    %18 = vector.shape_cast %17 : vector<128xf32> to vector<1x128xf32>
    %cst_9 = arith.constant 8.000000e+00 : f32
    %19 = vector.broadcast %cst_9 : f32 to vector<1x128xf32>
    %20 = arith.divf %18, %19 : vector<1x128xf32>
    %21 = vector.broadcast %20 : vector<1x128xf32> to vector<8x128xf32>
    %22 = arith.subf %16, %21 : vector<8x128xf32>
    %23 = arith.mulf %22, %22 : vector<8x128xf32>
    %cst_10 = arith.constant dense<0.000000e+00> : vector<128xf32>
    %24 = vector.multi_reduction <add>, %23, %cst_10 [0] : vector<8x128xf32> to vector<128xf32>
    %25 = vector.shape_cast %24 : vector<128xf32> to vector<1x128xf32>
    %cst_11 = arith.constant 8.000000e+00 : f32
    %26 = vector.broadcast %cst_11 : f32 to vector<1x128xf32>
    %27 = arith.divf %25, %26 : vector<1x128xf32>
    %c0_12 = arith.constant 0 : index
    %c0_13 = arith.constant 0 : index
    %28 = vector.load %arg5[%c0_12, %c0_13] : memref<1x128xf32, #tpu.memory_space<vmem>>, vector<1x128xf32>
    %cst_14 = arith.constant 9.99999974E-6 : f32
    %29 = vector.broadcast %cst_14 : f32 to vector<1x128xf32>
    %30 = arith.addf %27, %29 : vector<1x128xf32>
    %31 = math.rsqrt %30 : vector<1x128xf32>
    %32 = arith.mulf %28, %31 : vector<1x128xf32>
    %33 = vector.broadcast %32 : vector<1x128xf32> to vector<8x128xf32>
    %34 = arith.mulf %22, %33 : vector<8x128xf32>
    %c0_15 = arith.constant 0 : index
    %c0_16 = arith.constant 0 : index
    %35 = vector.load %arg6[%c0_15, %c0_16] : memref<1x128xf32, #tpu.memory_space<vmem>>, vector<1x128xf32>
    %36 = vector.broadcast %35 : vector<1x128xf32> to vector<8x128xf32>
    %37 = arith.addf %34, %36 : vector<8x128xf32>
    %cst_17 = arith.constant 0.000000e+00 : f32
    %38 = vector.broadcast %cst_17 : f32 to vector<8x128xf32>
    %39 = arith.maximumf %37, %38 : vector<8x128xf32>
    %40 = arith.truncf %39 : vector<8x128xf32> to vector<8x128xbf16>
    %c0_18 = arith.constant 0 : index
    %c0_19 = arith.constant 0 : index
    %41 = vector.load %arg7[%c0_18, %c0_19] : memref<128x128xbf16, #tpu.memory_space<vmem>>, vector<128x128xbf16>
    %cst_20 = arith.constant dense<0.000000e+00> : vector<8x128xf32>
    %42 = tpu.matmul %40, %41, %cst_20 {dimension_numbers = #tpu.dot_dimension_numbers<[1], [0], [0], [1], [0, 0, 1, 1], [], []>} : vector<8x128xbf16>, vector<128x128xbf16>, vector<8x128xf32> -> vector<8x128xf32>
    %c0_21 = arith.constant 0 : index
    %c0_22 = arith.constant 0 : index
    %43 = vector.load %arg8[%c0_21, %c0_22] : memref<1x128xf32, #tpu.memory_space<vmem>>, vector<1x128xf32>
    %44 = vector.broadcast %43 : vector<1x128xf32> to vector<8x128xf32>
    %45 = arith.addf %42, %44 : vector<8x128xf32>
    %c0_23 = arith.constant 0 : index
    %c0_24 = arith.constant 0 : index
    %46 = vector.load %arg9[%c0_23, %c0_24] : memref<8x128xf32, #tpu.memory_space<vmem>>, vector<8x128xf32>
    tpu.vector_store %arg9[%c0_23, %c0_24], %45 {strides = array<i32>} : memref<8x128xf32, #tpu.memory_space<vmem>>, vector<8x128xf32>,
    return
  }
  func.func @transform_0(%arg0: i32) -> (i32, i32) {
    %c0_i32 = arith.constant 0 : i32
    %c0_i32_0 = arith.constant 0 : i32
    %c0_i32_1 = arith.constant 0 : i32
    return %c0_i32, %c0_i32_0 : i32, i32
  }
  func.func @transform_1(%arg0: i32) -> (i32, i32) {
    %c0_i32 = arith.constant 0 : i32
    %c0_i32_0 = arith.constant 0 : i32
    %c0_i32_1 = arith.constant 0 : i32
    return %c0_i32, %c0_i32_0 : i32, i32
  }
  func.func @transform_2(%arg0: i32) -> (i32, i32) {
    %c0_i32 = arith.constant 0 : i32
    %c0_i32_0 = arith.constant 0 : i32
    %c0_i32_1 = arith.constant 0 : i32
    return %c0_i32, %c0_i32_0 : i32, i32
  }
  func.func @transform_3(%arg0: i32) -> (i32, i32) {
    %c0_i32 = arith.constant 0 : i32
    %c0_i32_0 = arith.constant 0 : i32
    %c0_i32_1 = arith.constant 0 : i32
    return %c0_i32, %c0_i32_0 : i32, i32
  }
  func.func @transform_4(%arg0: i32) -> (i32, i32) {
    %c0_i32 = arith.constant 0 : i32
    %c0_i32_0 = arith.constant 0 : i32
    %c0_i32_1 = arith.constant 0 : i32
    return %c0_i32, %c0_i32_0 : i32, i32
  }
  func.func @transform_5(%arg0: i32) -> (i32, i32) {
    %c0_i32 = arith.constant 0 : i32
    %c0_i32_0 = arith.constant 0 : i32
    %c0_i32_1 = arith.constant 0 : i32
    return %c0_i32, %c0_i32_0 : i32, i32
  }
  func.func @transform_6(%arg0: i32) -> (i32, i32) {
    %c0_i32 = arith.constant 0 : i32
    %c0_i32_0 = arith.constant 0 : i32
    %c0_i32_1 = arith.constant 0 : i32
    return %c0_i32, %c0_i32_0 : i32, i32
  }
  func.func @transform_7(%arg0: i32) -> (i32, i32) {
    %c0_i32 = arith.constant 0 : i32
    %c0_i32_0 = arith.constant 0 : i32
    %c0_i32_1 = arith.constant 0 : i32
    return %c0_i32, %c0_i32_0 : i32, i32
  }
  func.func @transform_8(%arg0: i32) -> (i32, i32) {
    %c0_i32 = arith.constant 0 : i32
    %c0_i32_0 = arith.constant 0 : i32
    %c0_i32_1 = arith.constant 0 : i32
    return %c0_i32, %c0_i32_0 : i32, i32
  }
}

</mosaic_0001>

<llo_original>
// kernel: predictor_forward.1
$region0: #{predictor_forward.1}
  #allocation0 [shape = 'u32[]', space=smem, size = 0x4, offset = 0x4, fixed_abs, tag = 'smem constant byte address 0x4 - core index']
  #allocation1 [shape = 'u32[144,128]{1,0:T(1,128)}', space=vmem, size = 0x12000, scoped, tag = 'internal scratch']
  %s0 = inlined_call_operand.hbm [shape: f32[8,32], index: 0, kind: input, shape index: {}]
  %s1 = inlined_call_operand.vmem [shape: f32[8,2], index: 1, kind: input, shape index: {}]
  %s2 = inlined_call_operand.vmem [shape: bf16[32,128], index: 2, kind: input, shape index: {}]
  %s3 = inlined_call_operand.vmem [shape: f32[2,128], index: 3, kind: input, shape index: {}]
  %s4 = inlined_call_operand.vmem [shape: f32[1,128], index: 4, kind: input, shape index: {}]
  %s5 = inlined_call_operand.vmem [shape: f32[1,128], index: 5, kind: input, shape index: {}]
  %s6 = inlined_call_operand.hbm [shape: bf16[128,128], index: 6, kind: input, shape index: {}]
  %s7 = inlined_call_operand.vmem [shape: f32[1,128], index: 7, kind: input, shape index: {}]
  %s8 = inlined_call_operand.hbm [shape: f32[8,128], index: 8, kind: output, shape index: {}]
  %s9 = sld [smem:[#allocation0]]
  $region50: #{predictor_forward.1} parent=0
    _
  %s11 = ssub.s32 1, %s9
  %s12 = scalar_select 0, %s11, %s9
  $region1: #{predictor_forward.1} parent=0
    #allocation2 [shape = 'u8[4096]{0}', space=vmem, size = 0x1000, scoped, tag = 'input window, operand 0, single buffered']
    #allocation3 [shape = 's32[1]{0}', space=sflag, size = 0x4, scoped, tag = 'scoped memory for predictor_forward.1']
    #allocation4 [shape = 's32[1]{0}', space=sflag, size = 0x4, scoped, tag = 'scoped memory for predictor_forward.1']
    #allocation5 [shape = 'u8[32768]{0}', space=vmem, size = 0x8000, scoped, tag = 'input window, operand 6, single buffered']
    #allocation6 [shape = 's32[1]{0}', space=sflag, size = 0x4, scoped, tag = 'scoped memory for predictor_forward.1']
    #allocation7 [shape = 'u8[4096]{0}', space=vmem, size = 0x1000, scoped, tag = 'output window, operand 0, single buffered']
    %13 = vsyncpa [#allocation3], 0
    %14 = vsyncpa [#allocation6], 0
    %15 = vsyncpa [#allocation4], 0
    // Predicated region
    $region2: #{predictor_forward.1} parent=1 // pred_check
      _
    $region3: #{predictor_forward.1} parent=1 // pred_check_branch
      %17 = sbr.rel (0) target = $region5
    $region4: #{predictor_forward.1} parent=1 // pred_region
      %s19 = ssub.s32 128, 128
      %20 = vsyncadd [#allocation3], %s19
      %s22 = sshll.u32 [#allocation2], 4
      %s23 = int_to_ptr.vmem [resolvable:$true] %s22
      %25 = dma.hbm_to_vmem [thread:$0]  %s0, 128, %s23, [#allocation3]
    $region5: #{predictor_forward.1} parent=1 // pred_fallthru
      _
    // Predicated region
    $region6: #{predictor_forward.1} parent=1 // pred_check
      _
    $region7: #{predictor_forward.1} parent=1 // pred_check_branch
      %27 = sbr.rel (0) target = $region9
    $region8: #{predictor_forward.1} parent=1 // pred_region
      _
    $region9: #{predictor_forward.1} parent=1 // pred_fallthru
      _
    // Predicated region
    $region10: #{predictor_forward.1} parent=1 // pred_check
      _
    $region11: #{predictor_forward.1} parent=1 // pred_check_branch
      %29 = sbr.rel (0) target = $region13
    $region12: #{predictor_forward.1} parent=1 // pred_region
      _
    $region13: #{predictor_forward.1} parent=1 // pred_fallthru
      _
    // Predicated region
    $region14: #{predictor_forward.1} parent=1 // pred_check
      _
    $region15: #{predictor_forward.1} parent=1 // pred_check_branch
      %31 = sbr.rel (0) target = $region17
    $region16: #{predictor_forward.1} parent=1 // pred_region
      _
    $region17: #{predictor_forward.1} parent=1 // pred_fallthru
      _
    // Predicated region
    $region18: #{predictor_forward.1} parent=1 // pred_check
      _
    $region19: #{predictor_forward.1} parent=1 // pred_check_branch
      %33 = sbr.rel (0) target = $region21
    $region20: #{predictor_forward.1} parent=1 // pred_region
      _
    $region21: #{predictor_forward.1} parent=1 // pred_fallthru
      _
    // Predicated region
    $region22: #{predictor_forward.1} parent=1 // pred_check
      _
    $region23: #{predictor_forward.1} parent=1 // pred_check_branch
      %35 = sbr.rel (0) target = $region25
    $region24: #{predictor_forward.1} parent=1 // pred_region
      _
    $region25: #{predictor_forward.1} parent=1 // pred_fallthru
      _
    // Predicated region
    $region26: #{predictor_forward.1} parent=1 // pred_check
      _
    $region27: #{predictor_forward.1} parent=1 // pred_check_branch
      %37 = sbr.rel (0) target = $region29
    $region28: #{predictor_forward.1} parent=1 // pred_region
      %s39 = ssub.s32 1024, 1024
      %40 = vsyncadd [#allocation6], %s39
      %s41 = sshll.u32 [#allocation5], 4
      %s42 = int_to_ptr.vmem [resolvable:$true] %s41
      %47 = dma.hbm_to_vmem [thread:$0]  %s6, 1024, %s42, [#allocation6], 64, 64, 4
    $region29: #{predictor_forward.1} parent=1 // pred_fallthru
      _
    // Predicated region
    $region30: #{predictor_forward.1} parent=1 // pred_check
      _
    $region31: #{predictor_forward.1} parent=1 // pred_check_branch
      %49 = sbr.rel (0) target = $region33
    $region32: #{predictor_forward.1} parent=1 // pred_region
      _
    $region33: #{predictor_forward.1} parent=1 // pred_fallthru
      _
    // Predicated region
    $region34: #{predictor_forward.1} parent=1 // pred_check
      _
    $region35: #{predictor_forward.1} parent=1 // pred_check_branch
      %51 = sbr.rel (0) target = $region37
    $region36: #{predictor_forward.1} parent=1 // pred_region
      %52 = dma.done [#allocation3], 128
    $region37: #{predictor_forward.1} parent=1 // pred_fallthru
      _
    // Predicated region
    $region38: #{predictor_forward.1} parent=1 // pred_check
      _
    $region39: #{predictor_forward.1} parent=1 // pred_check_branch
      %54 = sbr.rel (0) target = $region41
    $region40: #{predictor_forward.1} parent=1 // pred_region
      %55 = dma.done [#allocation6], 1024
    $region41: #{predictor_forward.1} parent=1 // pred_fallthru
      _
    %v57 = vld [vmem:[#allocation2] sm:$0xff]
    %v58 = vpack.c.bf16 %v57, %v57
    %v59 = vld [vmem:[%s2] sm:$0xf]
    %v60 = vld [vmem:[%s2 + $0x4] sm:$0xf]
    %v61 = vld [vmem:[%s2 + $0x8] sm:$0xf]
    %v62 = vld [vmem:[%s2 + $0xc] sm:$0xf]
    %v63 = vld [vmem:[%s1] sm:$0xff]
    %v64 = vld [vmem:[%s3] sm:$0x1]
    %66 = vset.pattern.permute.xlu0 0
    %67 = vperm.xlu0 %66, %v63
    %v68 = vpop.permute.xlu0 %67
    %v70 = vlaneseq
    %v71 = vshrl.u32 %v70, 7
    %v72 = vsub.s32 0, %v71
    %v73 = vrot.slane %v64, %v72
    %v74 = vmul.f32 %v68, %v73
    %v79 = vunpack.c.l.b16 %v59
    %v80 = vunpack.c.l.b16 %v60
    %v81 = vunpack.c.l.b16 %v61
    %v82 = vunpack.c.l.b16 %v62
    %v83 = vpack.c.b16 %v80, %v79
    %v84 = vpack.c.b16 %v82, %v81
    %vm87 = vcmask 261120
    %v89 = vsel %vm87, %v58, 0
    %91 = vmatprep.subr.bf16.mxu0 0
    %92 = vmatpush1.bf16.msra.mxu0 %v83
    %93 = vmatprep.subr.bf16.mxu0 0
    %94 = vmatpush1.bf16.msra.mxu0 %v84
    %95 = vmatprep.subr.bf16.mxu0 0
    %96 = vmatpush1.bf16.msra.mxu0 0
    %97 = vmatprep.subr.bf16.mxu0 0
    %98 = vmatpush1.bf16.msra.mxu0 0
    %99 = vmatprep.subr.bf16.mxu0 0
    %100 = vmatpush1.bf16.msra.mxu0 0
    %101 = vmatprep.subr.bf16.mxu0 0
    %102 = vmatpush1.bf16.msra.mxu0 0
    %103 = vmatprep.subr.bf16.mxu0 0
    %104 = vmatpush1.bf16.msra.mxu0 0
    %105 = vmatprep.subr.bf16.mxu0 0
    %106 = vmatpush1.bf16.msra.mxu0 0
    %107 = vmatprep.subr.bf16.mxu0 0
    %108 = vmatpush1.bf16.msra.mxu0 0
    %109 = vmatprep.subr.bf16.mxu0 0
    %110 = vmatpush1.bf16.msra.mxu0 0
    %111 = vmatprep.subr.bf16.mxu0 0
    %112 = vmatpush1.bf16.msra.mxu0 0
    %113 = vmatprep.subr.bf16.mxu0 0
    %114 = vmatpush1.bf16.msra.mxu0 0
    %115 = vmatprep.subr.bf16.mxu0 0
    %116 = vmatpush1.bf16.msra.mxu0 0
    %117 = vmatprep.subr.bf16.mxu0 0
    %118 = vmatpush1.bf16.msra.mxu0 0
    %119 = vmatprep.subr.bf16.mxu0 0
    %120 = vmatpush1.bf16.msra.mxu0 0
    %121 = vmatprep.subr.bf16.mxu0 0
    %122 = vmatpush1.bf16.msra.mxu0 0
    %123 = vmatprep.mubr.bf16.mxu0 0
    %124 = vmatmul.mubr.bf16.gmra.mrb[0].mxu0 %v89
    %v125 = vpop.f32.mrb[0].mxu0
    %v126 = vadd.f32 %v74, %v125
    %v127 = vpop.f32.mrb[0].mxu0
    %v128 = vpop.f32.mrb[0].mxu0
    %v129 = vpop.f32.mrb[0].mxu0
    %130 = vdwg.mxu0
    %v131 = vld [vmem:[%s3 + $0x1] sm:$0x1]
    %132 = vset.pattern.permute.xlu0 1
    %133 = vperm.xlu0 %132, %v63
    %v134 = vpop.permute.xlu0 %133
    %v136 = vlaneseq
    %v137 = vshrl.u32 %v136, 7
    %v138 = vsub.s32 0, %v137
    %v139 = vrot.slane %v131, %v138
    %v140 = vmul.f32 %v134, %v139
    %v141 = vadd.f32 %v126, %v140
    %v142 = vrot.slane %v141, 4
    %v143 = vadd.f32 %v141, %v142
    %v144 = vrot.slane %v143, 2
    %v145 = vadd.f32 %v143, %v144
    %v146 = vrot.slane %v145, 1
    %v147 = vadd.f32 %v145, %v146
    %v148 = vrcp.pop 8.0
    %v149 = vmul.f32 %v147, %v148
    %v150 = vsub.f32 %v141, %v149
    %v151 = vmul.f32 %v150, %v150
    %v152 = vrot.slane %v151, 4
    %v153 = vadd.f32 %v151, %v152
    %v154 = vrot.slane %v153, 2
    %v155 = vadd.f32 %v153, %v154
    %v156 = vrot.slane %v155, 1
    %v157 = vadd.f32 %v155, %v156
    %v158 = vmul.f32 %v157, %v148
    %v159 = vld [vmem:[%s4] sm:$0x1]
    %v160 = vadd.f32 %v158, 1e-05
    %v161 = vrsqrt.pop %v160
    %v162 = vmul.f32 %v159, %v161
    %v164 = vlaneseq
    %v165 = vshrl.u32 %v164, 7
    %v166 = vsub.s32 0, %v165
    %v167 = vrot.slane %v162, %v166
    %v169 = vmul.f32 %v150, %v167
    %v170 = vld [vmem:[%s5] sm:$0x1]
    %v172 = vlaneseq
    %v173 = vshrl.u32 %v172, 7
    %v174 = vsub.s32 0, %v173
    %v175 = vrot.slane %v170, %v174
    %v177 = vadd.f32 %v169, %v175
    %v178 = vmax.f32 %v177, 0.0
    %v179 = vpack.c.bf16 %v178, %v178
    %v180 = vld [vmem:[#allocation5] sm:$0xf]
    %v181 = vld [vmem:[#allocation5 + $0x4] sm:$0xf]
    %v182 = vld [vmem:[#allocation5 + $0x8] sm:$0xf]
    %v183 = vld [vmem:[#allocation5 + $0xc] sm:$0xf]
    %v184 = vld [vmem:[#allocation5 + $0x10] sm:$0xf]
    %v185 = vld [vmem:[#allocation5 + $0x14] sm:$0xf]
    %v186 = vld [vmem:[#allocation5 + $0x18] sm:$0xf]
    %v187 = vld [vmem:[#allocation5 + $0x1c] sm:$0xf]
    %v188 = vld [vmem:[#allocation5 + $0x20] sm:$0xf]
    %v189 = vld [vmem:[#allocation5 + $0x24] sm:$0xf]
    %v190 = vld [vmem:[#allocation5 + $0x28] sm:$0xf]
    %v191 = vld [vmem:[#allocation5 + $0x2c] sm:$0xf]
    %v192 = vld [vmem:[#allocation5 + $0x30] sm:$0xf]
    %v193 = vld [vmem:[#allocation5 + $0x34] sm:$0xf]
    %v194 = vld [vmem:[#allocation5 + $0x38] sm:$0xf]
    %v195 = vld [vmem:[#allocation5 + $0x3c] sm:$0xf]
    %v196 = vld [vmem:[%s7] sm:$0x1]
    %v198 = vlaneseq
    %v199 = vshrl.u32 %v198, 7
    %v200 = vsub.s32 0, %v199
    %v201 = vrot.slane %v196, %v200
    %v219 = vunpack.c.l.b16 %v180
    %v220 = vunpack.c.l.b16 %v181
    %v221 = vunpack.c.l.b16 %v182
    %v222 = vunpack.c.l.b16 %v183
    %v223 = vunpack.c.l.b16 %v184
    %v224 = vunpack.c.l.b16 %v185
    %v225 = vunpack.c.l.b16 %v186
    %v226 = vunpack.c.l.b16 %v187
    %v227 = vunpack.c.l.b16 %v188
    %v228 = vunpack.c.l.b16 %v189
    %v229 = vunpack.c.l.b16 %v190
    %v230 = vunpack.c.l.b16 %v191
    %v231 = vunpack.c.l.b16 %v192
    %v232 = vunpack.c.l.b16 %v193
    %v233 = vunpack.c.l.b16 %v194
    %v234 = vunpack.c.l.b16 %v195
    %v235 = vpack.c.b16 %v220, %v219
    %v236 = vpack.c.b16 %v222, %v221
    %v237 = vpack.c.b16 %v224, %v223
    %v238 = vpack.c.b16 %v226, %v225
    %v239 = vpack.c.b16 %v228, %v227
    %v240 = vpack.c.b16 %v230, %v229
    %v241 = vpack.c.b16 %v232, %v231
    %v242 = vpack.c.b16 %v234, %v233
    %251 = vmatprep.subr.bf16.mxu0 0
    %252 = vmatpush1.bf16.msra.mxu0 %v235
    %253 = vmatprep.subr.bf16.mxu0 0
    %254 = vmatpush1.bf16.msra.mxu0 %v236
    %255 = vmatprep.subr.bf16.mxu0 0
    %256 = vmatpush1.bf16.msra.mxu0 %v237
    %257 = vmatprep.subr.bf16.mxu0 0
    %258 = vmatpush1.bf16.msra.mxu0 %v238
    %259 = vmatprep.subr.bf16.mxu0 0
    %260 = vmatpush1.bf16.msra.mxu0 %v239
    %261 = vmatprep.subr.bf16.mxu0 0
    %262 = vmatpush1.bf16.msra.mxu0 %v240
    %263 = vmatprep.subr.bf16.mxu0 0
    %264 = vmatpush1.bf16.msra.mxu0 %v241
    %265 = vmatprep.subr.bf16.mxu0 0
    %266 = vmatpush1.bf16.msra.mxu0 %v242
    %267 = vmatprep.subr.bf16.mxu0 0
    %268 = vmatpush1.bf16.msra.mxu0 0
    %269 = vmatprep.subr.bf16.mxu0 0
    %270 = vmatpush1.bf16.msra.mxu0 0
    %271 = vmatprep.subr.bf16.mxu0 0
    %272 = vmatpush1.bf16.msra.mxu0 0
    %273 = vmatprep.subr.bf16.mxu0 0
    %274 = vmatpush1.bf16.msra.mxu0 0
    %275 = vmatprep.subr.bf16.mxu0 0
    %276 = vmatpush1.bf16.msra.mxu0 0
    %277 = vmatprep.subr.bf16.mxu0 0
    %278 = vmatpush1.bf16.msra.mxu0 0
    %279 = vmatprep.subr.bf16.mxu0 0
    %280 = vmatpush1.bf16.msra.mxu0 0
    %281 = vmatprep.subr.bf16.mxu0 0
    %282 = vmatpush1.bf16.msra.mxu0 0
    %283 = vmatprep.mubr.bf16.mxu0 0
    %284 = vmatmul.mubr.bf16.gmra.mrb[0].mxu0 %v179
    %v285 = vpop.f32.mrb[0].mxu0
    %v286 = vadd.f32 %v201, %v285
    %v287 = vpop.f32.mrb[0].mxu0
    %v288 = vpop.f32.mrb[0].mxu0
    %v289 = vpop.f32.mrb[0].mxu0
    %290 = vdwg.mxu0
    %291 = vst [vmem:[#allocation7] sm:$0xff] %v286
    // Predicated region
    $region42: #{predictor_forward.1} parent=1 // pred_check
      _
    $region43: #{predictor_forward.1} parent=1 // pred_check_branch
      %293 = sbr.rel (0) target = $region45
    $region44: #{predictor_forward.1} parent=1 // pred_region
      %s295 = ssub.s32 128, 128
      %296 = vsyncadd [#allocation4], %s295
      %s298 = sshll.u32 [#allocation7], 4
      %s299 = int_to_ptr.vmem [resolvable:$true] %s298
      %301 = dma.vmem_to_hbm [thread:$0]  %s299, 128, %s8, [#allocation4]
    $region45: #{predictor_forward.1} parent=1 // pred_fallthru
      _
    // Predicated region
    $region46: #{predictor_forward.1} parent=1 // pred_check
      _
    $region47: #{predictor_forward.1} parent=1 // pred_check_branch
      %303 = sbr.rel (0) target = $region49
    $region48: #{predictor_forward.1} parent=1 // pred_region
      %304 = dma.done [#allocation4], 128
    $region49: #{predictor_forward.1} parent=1 // pred_fallthru
      _
    %305 = vsyncpa [#allocation3], 1
    %306 = vsyncpa [#allocation6], 1
    %307 = vsyncpa [#allocation4], 1

</llo_original>
